<compile_context>
chip_gen: v5e
topology: v5e:2x2
jax: 0.10.0
libtpu: 0.0.40
codegen_flags: <defaults>
</compile_context>

<pallas_src>
import jax
import jax.numpy as jnp
from jax.experimental import pallas as pl
from jax.experimental.pallas import tpu as pltpu


def _round_up(n: int, m: int) -> int:
    return ((n + m - 1) // m) * m


def _num_tensorcores() -> int:
    # v7x has 2 TensorCores per chip (the "parallel" grid axis needs >= 2
    # blocks to use both); v5e/v6e have 1.  Fallback: assume 1.
    try:
        kind = jax.devices()[0].device_kind.lower()
    except Exception:
        return 1
    return 2 if "v7" in kind else 1


def highway_kernel(x_ref, w_ref, b_ref, o_ref):
    x = x_ref[...]                                    # (bb, E), input dtype

    # Cast the tile to the MXU operand dtype *in VMEM* (no extra HBM pass),
    # single fused matmul (bb, E) @ (E, 2E) -> (bb, 2E) with f32 accumulation.
    pg = jnp.dot(x.astype(w_ref.dtype), w_ref[...],
                 preferred_element_type=jnp.float32)
    pg = pg + b_ref[...]                              # f32 bias (broadcast)

    e = o_ref.shape[-1]
    # NOTE: at E % 128 == 0 these slices land on lane-tile boundaries; for
    # non-multiple-of-128 E the proj/gate split should move off the lane axis.
    proj = jnp.maximum(pg[:, :e], 0.0)                # relu    (VPU)
    gate = jax.nn.sigmoid(pg[:, e:])                  # sigmoid (EUP)

    xf = x.astype(jnp.float32)                        # f32 epilogue (v5e-safe)
    y = xf + gate * (proj - xf)                       # == g*p + (1-g)*x

    # TODO(synk): training-mode dropout (pltpu.prng_seed + stateful_bernoulli,
    # scale by 1/(1-p)) omitted; eval-mode dropout is identity.
    o_ref[...] = y.astype(o_ref.dtype)


def prepare_highway_params(w_proj, b_proj, w_gate, b_gate, *,
                           compute_dtype=jnp.bfloat16):
    """One-time parameter prep (do NOT call per forward step).

    Fuses [Wp | Wg] -> (E, 2E) and [bp | bg] -> (1, 2E).  Weights are stored in
    `compute_dtype` (bf16 default: bf16 MXU rate, half the weight traffic);
    biases stay f32 so the epilogue stays f32.  Weights must be laid out
    (in, out), i.e. PyTorch Linear.weight transposed.
    """
    w = jnp.concatenate([w_proj, w_gate], axis=1)                  # (E, 2E)
    if compute_dtype is not None:
        w = w.astype(compute_dtype)
    b = jnp.concatenate([b_proj, b_gate]).reshape(1, -1).astype(jnp.float32)
    return w, b


def highway_forward_fused(x, w_fused, b_fused, *, block_b=None):
    """Highway forward with pre-fused params.  x: (B, E)."""
    B, E = x.shape
    assert w_fused.shape == (E, 2 * E) and b_fused.shape == (1, 2 * E)

    # Batch tile: big (amortizes ~0.35us/step overhead; >=512 rows is ~85%+ of
    # the HBM roofline), clamped to the sublane-padded batch; on v7x capped so
    # the grid keeps >= 2 blocks for the two TensorCores.
    if block_b is None:
        block_b = 1024
    block_b = min(block_b, _round_up(B, 8))
    ncores = _num_tensorcores()
    if ncores > 1:
        block_b = min(block_b, _round_up(pl.cdiv(_round_up(B, 8), ncores), 8))
    block_b = max(8, _round_up(block_b, 8))

    # Ragged B: no pad/slice copies — Pallas clips the partial last block's
    # writeback, so garbage rows past B never reach HBM.
    grid = (pl.cdiv(B, block_b),)

    out_dtype = x.dtype            # output follows input dtype, not compute dtype
    xb = x.dtype.itemsize
    wb = w_fused.dtype.itemsize

    vmem_needed = (2 * block_b * E * xb                      # x tiles (double-buffered)
                   + 2 * block_b * E * out_dtype.itemsize    # y tiles (double-buffered)
                   + E * 2 * E * wb + 2 * E * 4              # weight + bias (single-buffered)
                   + 4 * block_b * 2 * E * 4)                # f32 intermediates
    vmem_limit = int(min(48 * 1024 * 1024, max(2 * vmem_needed, 8 * 1024 * 1024)))

    cost = pl.CostEstimate(
        flops=2 * B * E * (2 * E) + 8 * B * E,
        transcendentals=2 * B * E,                           # sigmoid ~ exp + recip
        bytes_accessed=(B * E * xb + E * 2 * E * wb + 2 * E * 4
                        + B * E * out_dtype.itemsize),
    )

    return pl.pallas_call(
        highway_kernel,
        out_shape=jax.ShapeDtypeStruct((B, E), out_dtype),
        grid_spec=pltpu.PrefetchScalarGridSpec(
            num_scalar_prefetch=0,
            grid=grid,
            in_specs=[
                pl.BlockSpec((block_b, E), lambda i: (i, 0)),        # x tile
                # Grid-invariant -> fetched once, single-buffered.
                pl.BlockSpec((E, 2 * E), lambda i: (0, 0),
                             pipeline_mode=pl.Buffered(1)),          # fused Wp|Wg
                pl.BlockSpec((1, 2 * E), lambda i: (0, 0),
                             pipeline_mode=pl.Buffered(1)),          # fused bias
            ],
            out_specs=pl.BlockSpec((block_b, E), lambda i: (i, 0)),
        ),
        compiler_params=pltpu.CompilerParams(
            dimension_semantics=("parallel",),
            vmem_limit_bytes=vmem_limit,
        ),
        cost_estimate=cost,
    )(x, w_fused, b_fused)


def highway_forward(x, w_proj, b_proj, w_gate, b_gate, *,
                    block_b=None, compute_dtype=jnp.bfloat16):
    """Convenience wrapper (fuses params per call).  For repeated use, call
    prepare_highway_params() once and reuse highway_forward_fused()."""
    w, b = prepare_highway_params(w_proj, b_proj, w_gate, b_gate,
                                  compute_dtype=compute_dtype)
    return highway_forward_fused(x, w, b, block_b=block_b)


def highway_reference(x, w_proj, b_proj, w_gate, b_gate):
    proj = jax.nn.relu(x @ w_proj + b_proj)
    gate = jax.nn.sigmoid(x @ w_gate + b_gate)
    return gate * proj + (1.0 - gate) * x


if __name__ == "__main__":
    # Small shapes consistent with the module: e_word = 128, small batch.
    B, E = 160, 128
    key = jax.random.PRNGKey(0)
    kx, kwp, kbp, kwg, kbg = jax.random.split(key, 5)

    bound = 1.0 / jnp.sqrt(E)
    x = jax.random.normal(kx, (B, E), dtype=jnp.float32)
    w_proj = jax.random.uniform(kwp, (E, E), jnp.float32, -bound, bound)  # (in, out)
    b_proj = jax.random.uniform(kbp, (E,), jnp.float32, -bound, bound)
    w_gate = jax.random.uniform(kwg, (E, E), jnp.float32, -bound, bound)  # (in, out)
    b_gate = jax.random.uniform(kbg, (E,), jnp.float32, -bound, bound)

    ref = highway_reference(x, w_proj, b_proj, w_gate, b_gate)

    # 1) Default path: bf16 MXU operands, f32 accumulation/epilogue, f32 output.
    w_bf, b_f = prepare_highway_params(w_proj, b_proj, w_gate, b_gate)
    out_bf = jax.block_until_ready(highway_forward_fused(x, w_bf, b_f))
    assert out_bf.shape == (B, E) and out_bf.dtype == jnp.float32
    assert jnp.allclose(out_bf, ref, atol=5e-2, rtol=5e-2), "bf16 mismatch"

    # 2) f32 compute path (tight tolerance).
    w_f32, _ = prepare_highway_params(w_proj, b_proj, w_gate, b_gate,
                                      compute_dtype=None)
    out_f32 = jax.block_until_ready(highway_forward_fused(x, w_f32, b_f))
    assert jnp.allclose(out_f32, ref, atol=3e-5, rtol=3e-5), "f32 mismatch"

    # 3) Ragged batch: multi-tile grid with a clipped partial last block
    #    (no pad / slice copies).
    out_odd = jax.block_until_ready(
        highway_forward_fused(x[:77], w_f32, b_f, block_b=32))
    assert out_odd.shape == (77, E)
    assert jnp.allclose(out_odd, ref[:77], atol=3e-5, rtol=3e-5), "ragged mismatch"

    print("KERNEL_OK")
</pallas_src>

<mosaic_0001>
module attributes {stable_mosaic.version = 11 : i64} {
  func.func @highway_kernel(%arg0: i32, %arg1: memref<160x128xf32, #tpu.memory_space<vmem>>, %arg2: memref<128x256xbf16, #tpu.memory_space<vmem>>, %arg3: memref<1x256xf32, #tpu.memory_space<vmem>>, %arg4: memref<160x128xf32, #tpu.memory_space<vmem>>) attributes {dimension_semantics = [#tpu.dimension_semantics<parallel>], iteration_bounds = array<i64: 1>, scalar_prefetch = 0 : i64, scratch_operands = 0 : i64, tpu.core_type = #tpu.core_type<tc>, window_params = [{transform_indices = @transform_0, window_bounds = array<i64: 160, 128>}, {pipeline_mode = #tpu.pipeline_mode<synchronous>, transform_indices = @transform_1, window_bounds = array<i64: 128, 256>}, {pipeline_mode = #tpu.pipeline_mode<synchronous>, transform_indices = @transform_2, window_bounds = array<i64: 1, 256>}, {transform_indices = @transform_3, window_bounds = array<i64: 160, 128>}]} {
    %c0 = arith.constant 0 : index
    %c0_0 = arith.constant 0 : index
    %0 = vector.load %arg1[%c0, %c0_0] : memref<160x128xf32, #tpu.memory_space<vmem>>, vector<160x128xf32>
    %1 = arith.truncf %0 : vector<160x128xf32> to vector<160x128xbf16>
    %c0_1 = arith.constant 0 : index
    %c0_2 = arith.constant 0 : index
    %2 = vector.load %arg2[%c0_1, %c0_2] : memref<128x256xbf16, #tpu.memory_space<vmem>>, vector<128x256xbf16>
    %cst = arith.constant dense<0.000000e+00> : vector<160x256xf32>
    %3 = tpu.matmul %1, %2, %cst {dimension_numbers = #tpu.dot_dimension_numbers<[1], [0], [0], [1], [0, 0, 1, 1], [], []>} : vector<160x128xbf16>, vector<128x256xbf16>, vector<160x256xf32> -> vector<160x256xf32>
    %c0_3 = arith.constant 0 : index
    %c0_4 = arith.constant 0 : index
    %4 = vector.load %arg3[%c0_3, %c0_4] : memref<1x256xf32, #tpu.memory_space<vmem>>, vector<1x256xf32>
    %5 = vector.broadcast %4 : vector<1x256xf32> to vector<160x256xf32>
    %6 = arith.addf %3, %5 : vector<160x256xf32>
    %7 = vector.extract_strided_slice %6 {offsets = [0, 0], sizes = [160, 128], strides = [1, 1]} : vector<160x256xf32> to vector<160x128xf32>
    %cst_5 = arith.constant 0.000000e+00 : f32
    %8 = vector.broadcast %cst_5 : f32 to vector<160x128xf32>
    %9 = arith.maximumf %7, %8 : vector<160x128xf32>
    %10 = vector.extract_strided_slice %6 {offsets = [0, 128], sizes = [160, 128], strides = [1, 1]} : vector<160x256xf32> to vector<160x128xf32>
    %11 = arith.negf %10 : vector<160x128xf32>
    %12 = math.exp %11 : vector<160x128xf32>
    %cst_6 = arith.constant 1.000000e+00 : f32
    %13 = vector.broadcast %cst_6 : f32 to vector<160x128xf32>
    %14 = arith.addf %13, %12 : vector<160x128xf32>
    %15 = arith.divf %13, %14 : vector<160x128xf32>
    %16 = arith.subf %9, %0 : vector<160x128xf32>
    %17 = arith.mulf %15, %16 : vector<160x128xf32>
    %18 = arith.addf %0, %17 : vector<160x128xf32>
    %c0_7 = arith.constant 0 : index
    %c0_8 = arith.constant 0 : index
    %19 = vector.load %arg4[%c0_7, %c0_8] : memref<160x128xf32, #tpu.memory_space<vmem>>, vector<160x128xf32>
    tpu.vector_store %arg4[%c0_7, %c0_8], %18 {strides = array<i32>} : memref<160x128xf32, #tpu.memory_space<vmem>>, vector<160x128xf32>,
    return
  }
  func.func @transform_0(%arg0: i32) -> (i32, i32) {
    %c0_i32 = arith.constant 0 : i32
    %c0_i32_0 = arith.constant 0 : i32
    return %arg0, %c0_i32 : i32, i32
  }
  func.func @transform_1(%arg0: i32) -> (i32, i32) {
    %c0_i32 = arith.constant 0 : i32
    %c0_i32_0 = arith.constant 0 : i32
    %c0_i32_1 = arith.constant 0 : i32
    return %c0_i32, %c0_i32_0 : i32, i32
  }
  func.func @transform_2(%arg0: i32) -> (i32, i32) {
    %c0_i32 = arith.constant 0 : i32
    %c0_i32_0 = arith.constant 0 : i32
    %c0_i32_1 = arith.constant 0 : i32
    return %c0_i32, %c0_i32_0 : i32, i32
  }
  func.func @transform_3(%arg0: i32) -> (i32, i32) {
    %c0_i32 = arith.constant 0 : i32
    %c0_i32_0 = arith.constant 0 : i32
    return %arg0, %c0_i32 : i32, i32
  }
}

</mosaic_0001>

<llo_original>
// kernel: tpu_custom_call.1
$region0: #{tpu_custom_call.1}
  #allocation0 [shape = 'u32[]', space=smem, size = 0x4, offset = 0x4, fixed_abs, tag = 'smem constant byte address 0x4 - core index']
  #allocation1 [shape = 'u32[72,128]{1,0:T(1,128)}', space=vmem, size = 0x9000, scoped, tag = 'internal scratch']
  %s0 = inlined_call_operand.hbm [shape: f32[160,128], index: 0, kind: input, shape index: {}]
  %s1 = inlined_call_operand.hbm [shape: bf16[128,256], index: 1, kind: input, shape index: {}]
  %s2 = inlined_call_operand.hbm [shape: f32[1,256], index: 2, kind: input, shape index: {}]
  %s3 = inlined_call_operand.hbm [shape: f32[160,128], index: 3, kind: output, shape index: {}]
  %s4 = sld [smem:[#allocation0]]
  $region34: #{tpu_custom_call.1} parent=0
    _
  %s6 = ssub.s32 1, %s4
  %s7 = scalar_select 0, %s6, %s4
  $region1: #{tpu_custom_call.1} parent=0
    #allocation2 [shape = 'u8[81920]{0}', space=vmem, size = 0x14000, scoped, tag = 'input window, operand 0, single buffered']
    #allocation3 [shape = 's32[1]{0}', space=sflag, size = 0x4, scoped, tag = 'scoped memory for tpu_custom_call.1']
    #allocation4 [shape = 's32[1]{0}', space=sflag, size = 0x4, scoped, tag = 'scoped memory for tpu_custom_call.1']
    #allocation5 [shape = 'u8[65536]{0}', space=vmem, size = 0x10000, scoped, tag = 'input window, operand 1, single buffered']
    #allocation6 [shape = 's32[1]{0}', space=sflag, size = 0x4, scoped, tag = 'scoped memory for tpu_custom_call.1']
    #allocation7 [shape = 'u8[1024]{0}', space=vmem, size = 0x400, scoped, tag = 'input window, operand 2, single buffered']
    #allocation8 [shape = 'u8[81920]{0}', space=vmem, size = 0x14000, scoped, tag = 'output window, operand 0, single buffered']
    %8 = vsyncpa [#allocation3], 0
    %9 = vsyncpa [#allocation6], 0
    %10 = vsyncpa [#allocation4], 0
    // Predicated region
    $region2: #{tpu_custom_call.1} parent=1 // pred_check
      _
    $region3: #{tpu_custom_call.1} parent=1 // pred_check_branch
      %12 = sbr.rel (0) target = $region5
    $region4: #{tpu_custom_call.1} parent=1 // pred_region
      %14 = vsyncadd [#allocation3], 0
      %s15 = sshll.u32 %s0, 4
      %s16 = int_to_ptr.hbm [resolvable:$true] %s15
      %s17 = sshll.u32 [#allocation2], 4
      %s18 = int_to_ptr.vmem [resolvable:$true] %s17
      %23 = dma.hbm_to_vmem [thread:$0]  %s16, 2560, %s18, [#allocation3], 128, 128, 8
    $region5: #{tpu_custom_call.1} parent=1 // pred_fallthru
      _
    // Predicated region
    $region6: #{tpu_custom_call.1} parent=1 // pred_check
      _
    $region7: #{tpu_custom_call.1} parent=1 // pred_check_branch
      %25 = sbr.rel (0) target = $region9
    $region8: #{tpu_custom_call.1} parent=1 // pred_region
      %27 = vsyncadd [#allocation6], 0
      %s28 = sshll.u32 %s1, 4
      %s29 = int_to_ptr.hbm [resolvable:$true] %s28
      %s30 = sshll.u32 [#allocation5], 4
      %s31 = int_to_ptr.vmem [resolvable:$true] %s30
      %36 = dma.hbm_to_vmem [thread:$0]  %s29, 2048, %s31, [#allocation6], 128, 128, 8
    $region9: #{tpu_custom_call.1} parent=1 // pred_fallthru
      _
    // Predicated region
    $region10: #{tpu_custom_call.1} parent=1 // pred_check
      _
    $region11: #{tpu_custom_call.1} parent=1 // pred_check_branch
      %38 = sbr.rel (0) target = $region13
    $region12: #{tpu_custom_call.1} parent=1 // pred_region
      %40 = vsyncadd [#allocation6], 0
      %s42 = sshll.u32 %s2, 4
      %s43 = int_to_ptr.hbm [resolvable:$true] %s42
      %s44 = sshll.u32 [#allocation7], 4
      %s45 = int_to_ptr.vmem [resolvable:$true] %s44
      %47 = dma.hbm_to_vmem [thread:$0]  %s43, 32, %s45, [#allocation6]
    $region13: #{tpu_custom_call.1} parent=1 // pred_fallthru
      _
    // Predicated region
    $region14: #{tpu_custom_call.1} parent=1 // pred_check
      _
    $region15: #{tpu_custom_call.1} parent=1 // pred_check_branch
      %49 = sbr.rel (0) target = $region17
    $region16: #{tpu_custom_call.1} parent=1 // pred_region
      %51 = dma.done [#allocation3], 2560
    $region17: #{tpu_custom_call.1} parent=1 // pred_fallthru
      _
    // Predicated region
    $region18: #{tpu_custom_call.1} parent=1 // pred_check
      _
    $region19: #{tpu_custom_call.1} parent=1 // pred_check_branch
      %53 = sbr.rel (0) target = $region21
    $region20: #{tpu_custom_call.1} parent=1 // pred_region
      %55 = dma.done [#allocation6], 2048
    $region21: #{tpu_custom_call.1} parent=1 // pred_fallthru
      _
    // Predicated region
    $region22: #{tpu_custom_call.1} parent=1 // pred_check
      _
    $region23: #{tpu_custom_call.1} parent=1 // pred_check_branch
      %57 = sbr.rel (0) target = $region25
    $region24: #{tpu_custom_call.1} parent=1 // pred_region
      %59 = dma.done [#allocation6], 32
    $region25: #{tpu_custom_call.1} parent=1 // pred_fallthru
      _
    %v60 = vld [vmem:[#allocation2] sm:$0xff]
    %v61 = vld [vmem:[#allocation2 + $0x8] sm:$0xff]
    %v62 = vld [vmem:[#allocation2 + $0x10] sm:$0xff]
    %v63 = vld [vmem:[#allocation2 + $0x18] sm:$0xff]
    %v64 = vld [vmem:[#allocation2 + $0x20] sm:$0xff]
    %v65 = vld [vmem:[#allocation2 + $0x28] sm:$0xff]
    %v66 = vld [vmem:[#allocation2 + $0x30] sm:$0xff]
    %v67 = vld [vmem:[#allocation2 + $0x38] sm:$0xff]
    %v68 = vld [vmem:[#allocation2 + $0x40] sm:$0xff]
    %v69 = vld [vmem:[#allocation2 + $0x48] sm:$0xff]
    %v70 = vld [vmem:[#allocation2 + $0x50] sm:$0xff]
    %v71 = vld [vmem:[#allocation2 + $0x58] sm:$0xff]
    %v72 = vld [vmem:[#allocation2 + $0x60] sm:$0xff]
    %v73 = vld [vmem:[#allocation2 + $0x68] sm:$0xff]
    %v74 = vld [vmem:[#allocation2 + $0x70] sm:$0xff]
    %v75 = vld [vmem:[#allocation2 + $0x78] sm:$0xff]
    %v76 = vld [vmem:[#allocation2 + $0x80] sm:$0xff]
    %v77 = vld [vmem:[#allocation2 + $0x88] sm:$0xff]
    %v78 = vld [vmem:[#allocation2 + $0x90] sm:$0xff]
    %v79 = vld [vmem:[#allocation2 + $0x98] sm:$0xff]
    %v80 = vpack.c.bf16 %v61, %v60
    %v81 = vpack.c.bf16 %v63, %v62
    %v82 = vpack.c.bf16 %v65, %v64
    %v83 = vpack.c.bf16 %v67, %v66
    %v84 = vpack.c.bf16 %v69, %v68
    %v85 = vpack.c.bf16 %v71, %v70
    %v86 = vpack.c.bf16 %v73, %v72
    %v87 = vpack.c.bf16 %v75, %v74
    %v88 = vpack.c.bf16 %v77, %v76
    %v89 = vpack.c.bf16 %v79, %v78
    %v90 = vld [vmem:[#allocation5] sm:$0xff]
    %v91 = vld [vmem:[#allocation5 + $0x8] sm:$0xff]
    %v92 = vld [vmem:[#allocation5 + $0x10] sm:$0xff]
    %v93 = vld [vmem:[#allocation5 + $0x18] sm:$0xff]
    %v94 = vld [vmem:[#allocation5 + $0x20] sm:$0xff]
    %v95 = vld [vmem:[#allocation5 + $0x28] sm:$0xff]
    %v96 = vld [vmem:[#allocation5 + $0x30] sm:$0xff]
    %v97 = vld [vmem:[#allocation5 + $0x38] sm:$0xff]
    %v98 = vld [vmem:[#allocation5 + $0x40] sm:$0xff]
    %v99 = vld [vmem:[#allocation5 + $0x48] sm:$0xff]
    %v100 = vld [vmem:[#allocation5 + $0x50] sm:$0xff]
    %v101 = vld [vmem:[#allocation5 + $0x58] sm:$0xff]
    %v102 = vld [vmem:[#allocation5 + $0x60] sm:$0xff]
    %v103 = vld [vmem:[#allocation5 + $0x68] sm:$0xff]
    %v104 = vld [vmem:[#allocation5 + $0x70] sm:$0xff]
    %v105 = vld [vmem:[#allocation5 + $0x78] sm:$0xff]
    %v106 = vld [vmem:[#allocation7] sm:$0x3]
    %v108 = vperm.slane %v106, 0
    %v109 = vperm.slane %v106, 1
    %v128 = vunpack.c.l.b16 %v90
    %v129 = vunpack.c.h.b16 %v90
    %v130 = vunpack.c.l.b16 %v91
    %v131 = vunpack.c.h.b16 %v91
    %v132 = vunpack.c.l.b16 %v92
    %v133 = vunpack.c.h.b16 %v92
    %v134 = vunpack.c.l.b16 %v93
    %v135 = vunpack.c.h.b16 %v93
    %v136 = vunpack.c.l.b16 %v94
    %v137 = vunpack.c.h.b16 %v94
    %v138 = vunpack.c.l.b16 %v95
    %v139 = vunpack.c.h.b16 %v95
    %v140 = vunpack.c.l.b16 %v96
    %v141 = vunpack.c.h.b16 %v96
    %v142 = vunpack.c.l.b16 %v97
    %v143 = vunpack.c.h.b16 %v97
    %v144 = vunpack.c.l.b16 %v98
    %v145 = vunpack.c.h.b16 %v98
    %v146 = vunpack.c.l.b16 %v99
    %v147 = vunpack.c.h.b16 %v99
    %v148 = vunpack.c.l.b16 %v100
    %v149 = vunpack.c.h.b16 %v100
    %v150 = vunpack.c.l.b16 %v101
    %v151 = vunpack.c.h.b16 %v101
    %v152 = vunpack.c.l.b16 %v102
    %v153 = vunpack.c.h.b16 %v102
    %v154 = vunpack.c.l.b16 %v103
    %v155 = vunpack.c.h.b16 %v103
    %v156 = vunpack.c.l.b16 %v104
    %v157 = vunpack.c.h.b16 %v104
    %v158 = vunpack.c.l.b16 %v105
    %v159 = vunpack.c.h.b16 %v105
    %v160 = vpack.c.b16 %v130, %v128
    %v161 = vpack.c.b16 %v131, %v129
    %v162 = vpack.c.b16 %v134, %v132
    %v163 = vpack.c.b16 %v135, %v133
    %v164 = vpack.c.b16 %v138, %v136
    %v165 = vpack.c.b16 %v139, %v137
    %v166 = vpack.c.b16 %v142, %v140
    %v167 = vpack.c.b16 %v143, %v141
    %v168 = vpack.c.b16 %v146, %v144
    %v169 = vpack.c.b16 %v147, %v145
    %v170 = vpack.c.b16 %v150, %v148
    %v171 = vpack.c.b16 %v151, %v149
    %v172 = vpack.c.b16 %v154, %v152
    %v173 = vpack.c.b16 %v155, %v153
    %v174 = vpack.c.b16 %v158, %v156
    %v175 = vpack.c.b16 %v159, %v157
    %192 = vmatpush.bf16.msra.mxu0 %v174
    %193 = vmatpush.bf16.msra.mxu0 %v172
    %194 = vmatpush.bf16.msra.mxu0 %v170
    %195 = vmatpush.bf16.msra.mxu0 %v168
    %196 = vmatpush.bf16.msra.mxu0 %v166
    %197 = vmatpush.bf16.msra.mxu0 %v164
    %198 = vmatpush.bf16.msra.mxu0 %v162
    %199 = vmatpush.bf16.msra.mxu0 %v160
    %200 = vmatmul.bf16.gmra.mxu0 %v80
    %v201 = vpop.f32.mrf.mxu0
    %v202 = vadd.f32 %v108, %v201
    %v203 = vpop.f32.mrf.mxu0
    %v204 = vadd.f32 %v108, %v203
    %205 = vmatmul.bf16.gmra.mxu0 %v81
    %v206 = vpop.f32.mrf.mxu0
    %v207 = vadd.f32 %v108, %v206
    %v208 = vpop.f32.mrf.mxu0
    %v209 = vadd.f32 %v108, %v208
    %210 = vmatmul.bf16.gmra.mxu0 %v82
    %v211 = vpop.f32.mrf.mxu0
    %v212 = vadd.f32 %v108, %v211
    %v213 = vpop.f32.mrf.mxu0
    %v214 = vadd.f32 %v108, %v213
    %215 = vmatmul.bf16.gmra.mxu0 %v83
    %v216 = vpop.f32.mrf.mxu0
    %v217 = vadd.f32 %v108, %v216
    %v218 = vpop.f32.mrf.mxu0
    %v219 = vadd.f32 %v108, %v218
    %220 = vmatmul.bf16.gmra.mxu0 %v84
    %v221 = vpop.f32.mrf.mxu0
    %v222 = vadd.f32 %v108, %v221
    %v223 = vpop.f32.mrf.mxu0
    %v224 = vadd.f32 %v108, %v223
    %225 = vmatmul.bf16.gmra.mxu0 %v85
    %v226 = vpop.f32.mrf.mxu0
    %v227 = vadd.f32 %v108, %v226
    %v228 = vpop.f32.mrf.mxu0
    %v229 = vadd.f32 %v108, %v228
    %230 = vmatmul.bf16.gmra.mxu0 %v86
    %v231 = vpop.f32.mrf.mxu0
    %v232 = vadd.f32 %v108, %v231
    %v233 = vpop.f32.mrf.mxu0
    %v234 = vadd.f32 %v108, %v233
    %235 = vmatmul.bf16.gmra.mxu0 %v87
    %v236 = vpop.f32.mrf.mxu0
    %v237 = vadd.f32 %v108, %v236
    %v238 = vpop.f32.mrf.mxu0
    %v239 = vadd.f32 %v108, %v238
    %240 = vmatmul.bf16.gmra.mxu0 %v88
    %v241 = vpop.f32.mrf.mxu0
    %v242 = vadd.f32 %v108, %v241
    %v243 = vpop.f32.mrf.mxu0
    %v244 = vadd.f32 %v108, %v243
    %245 = vmatmul.bf16.gmra.mxu0 %v89
    %v246 = vpop.f32.mrf.mxu0
    %v247 = vadd.f32 %v108, %v246
    %v248 = vpop.f32.mrf.mxu0
    %v249 = vadd.f32 %v108, %v248
    %250 = vdwg.mxu0
    %251 = vmatpush.bf16.msra.mxu0 %v175
    %252 = vmatpush.bf16.msra.mxu0 %v173
    %253 = vmatpush.bf16.msra.mxu0 %v171
    %254 = vmatpush.bf16.msra.mxu0 %v169
    %255 = vmatpush.bf16.msra.mxu0 %v167
    %256 = vmatpush.bf16.msra.mxu0 %v165
    %257 = vmatpush.bf16.msra.mxu0 %v163
    %258 = vmatpush.bf16.msra.mxu0 %v161
    %259 = vmatmul.bf16.gmra.mxu0 %v80
    %v260 = vpop.f32.mrf.mxu0
    %v261 = vadd.f32 %v109, %v260
    %v262 = vpop.f32.mrf.mxu0
    %v263 = vadd.f32 %v109, %v262
    %264 = vmatmul.bf16.gmra.mxu0 %v81
    %v265 = vpop.f32.mrf.mxu0
    %v266 = vadd.f32 %v109, %v265
    %v267 = vpop.f32.mrf.mxu0
    %v268 = vadd.f32 %v109, %v267
    %269 = vmatmul.bf16.gmra.mxu0 %v82
    %v270 = vpop.f32.mrf.mxu0
    %v271 = vadd.f32 %v109, %v270
    %v272 = vpop.f32.mrf.mxu0
    %v273 = vadd.f32 %v109, %v272
    %274 = vmatmul.bf16.gmra.mxu0 %v83
    %v275 = vpop.f32.mrf.mxu0
    %v276 = vadd.f32 %v109, %v275
    %v277 = vpop.f32.mrf.mxu0
    %v278 = vadd.f32 %v109, %v277
    %279 = vmatmul.bf16.gmra.mxu0 %v84
    %v280 = vpop.f32.mrf.mxu0
    %v281 = vadd.f32 %v109, %v280
    %v282 = vpop.f32.mrf.mxu0
    %v283 = vadd.f32 %v109, %v282
    %284 = vmatmul.bf16.gmra.mxu0 %v85
    %v285 = vpop.f32.mrf.mxu0
    %v286 = vadd.f32 %v109, %v285
    %v287 = vpop.f32.mrf.mxu0
    %v288 = vadd.f32 %v109, %v287
    %289 = vmatmul.bf16.gmra.mxu0 %v86
    %v290 = vpop.f32.mrf.mxu0
    %v291 = vadd.f32 %v109, %v290
    %v292 = vpop.f32.mrf.mxu0
    %v293 = vadd.f32 %v109, %v292
    %294 = vmatmul.bf16.gmra.mxu0 %v87
    %v295 = vpop.f32.mrf.mxu0
    %v296 = vadd.f32 %v109, %v295
    %v297 = vpop.f32.mrf.mxu0
    %v298 = vadd.f32 %v109, %v297
    %299 = vmatmul.bf16.gmra.mxu0 %v88
    %v300 = vpop.f32.mrf.mxu0
    %v301 = vadd.f32 %v109, %v300
    %v302 = vpop.f32.mrf.mxu0
    %v303 = vadd.f32 %v109, %v302
    %304 = vmatmul.bf16.gmra.mxu0 %v89
    %v305 = vpop.f32.mrf.mxu0
    %v306 = vadd.f32 %v109, %v305
    %v307 = vpop.f32.mrf.mxu0
    %v308 = vadd.f32 %v109, %v307
    %309 = vdwg.mxu0
    %v310 = vmax.f32 %v202, 0.0
    %v311 = vmax.f32 %v204, 0.0
    %v312 = vmax.f32 %v207, 0.0
    %v313 = vmax.f32 %v209, 0.0
    %v314 = vmax.f32 %v212, 0.0
    %v315 = vmax.f32 %v214, 0.0
    %v316 = vmax.f32 %v217, 0.0
    %v317 = vmax.f32 %v219, 0.0
    %v318 = vmax.f32 %v222, 0.0
    %v319 = vmax.f32 %v224, 0.0
    %v320 = vmax.f32 %v227, 0.0
    %v321 = vmax.f32 %v229, 0.0
    %v322 = vmax.f32 %v232, 0.0
    %v323 = vmax.f32 %v234, 0.0
    %v324 = vmax.f32 %v237, 0.0
    %v325 = vmax.f32 %v239, 0.0
    %v326 = vmax.f32 %v242, 0.0
    %v327 = vmax.f32 %v244, 0.0
    %v328 = vmax.f32 %v247, 0.0
    %v329 = vmax.f32 %v249, 0.0
    %v330 = vxor.u32 %v261, 2147483648
    %v331 = vxor.u32 %v263, 2147483648
    %v332 = vxor.u32 %v266, 2147483648
    %v333 = vxor.u32 %v268, 2147483648
    %v334 = vxor.u32 %v271, 2147483648
    %v335 = vxor.u32 %v273, 2147483648
    %v336 = vxor.u32 %v276, 2147483648
    %v337 = vxor.u32 %v278, 2147483648
    %v338 = vxor.u32 %v281, 2147483648
    %v339 = vxor.u32 %v283, 2147483648
    %v340 = vxor.u32 %v286, 2147483648
    %v341 = vxor.u32 %v288, 2147483648
    %v342 = vxor.u32 %v291, 2147483648
    %v343 = vxor.u32 %v293, 2147483648
    %v344 = vxor.u32 %v296, 2147483648
    %v345 = vxor.u32 %v298, 2147483648
    %v346 = vxor.u32 %v301, 2147483648
    %v347 = vxor.u32 %v303, 2147483648
    %v348 = vxor.u32 %v306, 2147483648
    %v349 = vxor.u32 %v308, 2147483648
    %v350 = vmul.f32 %v330, 1.442695
    %v351 = vpow.pop %v350
    %v352 = vmul.f32 %v331, 1.442695
    %v353 = vpow.pop %v352
    %v354 = vmul.f32 %v332, 1.442695
    %v355 = vpow.pop %v354
    %v356 = vmul.f32 %v333, 1.442695
    %v357 = vpow.pop %v356
    %v358 = vmul.f32 %v334, 1.442695
    %v359 = vpow.pop %v358
    %v360 = vmul.f32 %v335, 1.442695
    %v361 = vpow.pop %v360
    %v362 = vmul.f32 %v336, 1.442695
    %v363 = vpow.pop %v362
    %v364 = vmul.f32 %v337, 1.442695
    %v365 = vpow.pop %v364
    %v366 = vmul.f32 %v338, 1.442695
    %v367 = vpow.pop %v366
    %v368 = vmul.f32 %v339, 1.442695
    %v369 = vpow.pop %v368
    %v370 = vmul.f32 %v340, 1.442695
    %v371 = vpow.pop %v370
    %v372 = vmul.f32 %v341, 1.442695
    %v373 = vpow.pop %v372
    %v374 = vmul.f32 %v342, 1.442695
    %v375 = vpow.pop %v374
    %v376 = vmul.f32 %v343, 1.442695
    %v377 = vpow.pop %v376
    %v378 = vmul.f32 %v344, 1.442695
    %v379 = vpow.pop %v378
    %v380 = vmul.f32 %v345, 1.442695
    %v381 = vpow.pop %v380
    %v382 = vmul.f32 %v346, 1.442695
    %v383 = vpow.pop %v382
    %v384 = vmul.f32 %v347, 1.442695
    %v385 = vpow.pop %v384
    %v386 = vmul.f32 %v348, 1.442695
    %v387 = vpow.pop %v386
    %v388 = vmul.f32 %v349, 1.442695
    %v389 = vpow.pop %v388
    %v390 = vadd.f32 %v351, 1.0
    %v391 = vadd.f32 %v353, 1.0
    %v392 = vadd.f32 %v355, 1.0
    %v393 = vadd.f32 %v357, 1.0
    %v394 = vadd.f32 %v359, 1.0
    %v395 = vadd.f32 %v361, 1.0
    %v396 = vadd.f32 %v363, 1.0
    %v397 = vadd.f32 %v365, 1.0
    %v398 = vadd.f32 %v367, 1.0
    %v399 = vadd.f32 %v369, 1.0
    %v400 = vadd.f32 %v371, 1.0
    %v401 = vadd.f32 %v373, 1.0
    %v402 = vadd.f32 %v375, 1.0
    %v403 = vadd.f32 %v377, 1.0
    %v404 = vadd.f32 %v379, 1.0
    %v405 = vadd.f32 %v381, 1.0
    %v406 = vadd.f32 %v383, 1.0
    %v407 = vadd.f32 %v385, 1.0
    %v408 = vadd.f32 %v387, 1.0
    %v409 = vadd.f32 %v389, 1.0
    %v410 = vrcp.pop %v390
    %v411 = vmul.f32 %v390, %v410
    %v412 = vsub.f32 1.0, %v411
    %v413 = vmul.f32 %v410, %v412
    %v414 = vadd.f32 %v410, %v413
    %vm415 = vweird.f32 %v390
    %vm416 = vweird.f32 %v410
    %vm417 = vmor %vm415, %vm416
    %v418 = vsel %vm417, %v410, %v414
    %v419 = vand.u32 2147483647, %v390
    %vm420 = vcmp.eq.f32.partialorder %v419, 8.507059e+37
    %v421 = vand.u32 %v390, 2147483648
    %v422 = vor.u32 1.1754944e-38, %v421
    %v423 = vsel %vm420, %v422, %v418
    %v424 = vmul.f32 1.0, %v423
    %v425 = vrcp.pop %v391
    %v426 = vmul.f32 %v391, %v425
    %v427 = vsub.f32 1.0, %v426
    %v428 = vmul.f32 %v425, %v427
    %v429 = vadd.f32 %v425, %v428
    %vm430 = vweird.f32 %v391
    %vm431 = vweird.f32 %v425
    %vm432 = vmor %vm430, %vm431
    %v433 = vsel %vm432, %v425, %v429
    %v434 = vand.u32 2147483647, %v391
    %vm435 = vcmp.eq.f32.partialorder %v434, 8.507059e+37
    %v436 = vand.u32 %v391, 2147483648
    %v437 = vor.u32 1.1754944e-38, %v436
    %v438 = vsel %vm435, %v437, %v433
    %v439 = vmul.f32 1.0, %v438
    %v440 = vrcp.pop %v392
    %v441 = vmul.f32 %v392, %v440
    %v442 = vsub.f32 1.0, %v441
    %v443 = vmul.f32 %v440, %v442
    %v444 = vadd.f32 %v440, %v443
    %vm445 = vweird.f32 %v392
    %vm446 = vweird.f32 %v440
    %vm447 = vmor %vm445, %vm446
    %v448 = vsel %vm447, %v440, %v444
    %v449 = vand.u32 2147483647, %v392
    %vm450 = vcmp.eq.f32.partialorder %v449, 8.507059e+37
    %v451 = vand.u32 %v392, 2147483648
    %v452 = vor.u32 1.1754944e-38, %v451
    %v453 = vsel %vm450, %v452, %v448
    %v454 = vmul.f32 1.0, %v453
    %v455 = vrcp.pop %v393
    %v456 = vmul.f32 %v393, %v455
    %v457 = vsub.f32 1.0, %v456
    %v458 = vmul.f32 %v455, %v457
    %v459 = vadd.f32 %v455, %v458
    %vm460 = vweird.f32 %v393
    %vm461 = vweird.f32 %v455
    %vm462 = vmor %vm460, %vm461
    %v463 = vsel %vm462, %v455, %v459
    %v464 = vand.u32 2147483647, %v393
    %vm465 = vcmp.eq.f32.partialorder %v464, 8.507059e+37
    %v466 = vand.u32 %v393, 2147483648
    %v467 = vor.u32 1.1754944e-38, %v466
    %v468 = vsel %vm465, %v467, %v463
    %v469 = vmul.f32 1.0, %v468
    %v470 = vrcp.pop %v394
    %v471 = vmul.f32 %v394, %v470
    %v472 = vsub.f32 1.0, %v471
    %v473 = vmul.f32 %v470, %v472
    %v474 = vadd.f32 %v470, %v473
    %vm475 = vweird.f32 %v394
    %vm476 = vweird.f32 %v470
    %vm477 = vmor %vm475, %vm476
    %v478 = vsel %vm477, %v470, %v474
    %v479 = vand.u32 2147483647, %v394
    %vm480 = vcmp.eq.f32.partialorder %v479, 8.507059e+37
    %v481 = vand.u32 %v394, 2147483648
    %v482 = vor.u32 1.1754944e-38, %v481
    %v483 = vsel %vm480, %v482, %v478
    %v484 = vmul.f32 1.0, %v483
    %v485 = vrcp.pop %v395
    %v486 = vmul.f32 %v395, %v485
    %v487 = vsub.f32 1.0, %v486
    %v488 = vmul.f32 %v485, %v487
    %v489 = vadd.f32 %v485, %v488
    %vm490 = vweird.f32 %v395
    %vm491 = vweird.f32 %v485
    %vm492 = vmor %vm490, %vm491
    %v493 = vsel %vm492, %v485, %v489
    %v494 = vand.u32 2147483647, %v395
    %vm495 = vcmp.eq.f32.partialorder %v494, 8.507059e+37
    %v496 = vand.u32 %v395, 2147483648
    %v497 = vor.u32 1.1754944e-38, %v496
    %v498 = vsel %vm495, %v497, %v493
    %v499 = vmul.f32 1.0, %v498
    %v500 = vrcp.pop %v396
    %v501 = vmul.f32 %v396, %v500
    %v502 = vsub.f32 1.0, %v501
    %v503 = vmul.f32 %v500, %v502
    %v504 = vadd.f32 %v500, %v503
    %vm505 = vweird.f32 %v396
    %vm506 = vweird.f32 %v500
    %vm507 = vmor %vm505, %vm506
    %v508 = vsel %vm507, %v500, %v504
    %v509 = vand.u32 2147483647, %v396
    %vm510 = vcmp.eq.f32.partialorder %v509, 8.507059e+37
    %v511 = vand.u32 %v396, 2147483648
    %v512 = vor.u32 1.1754944e-38, %v511
    %v513 = vsel %vm510, %v512, %v508
    %v514 = vmul.f32 1.0, %v513
    %v515 = vrcp.pop %v397
    %v516 = vmul.f32 %v397, %v515
    %v517 = vsub.f32 1.0, %v516
    %v518 = vmul.f32 %v515, %v517
    %v519 = vadd.f32 %v515, %v518
    %vm520 = vweird.f32 %v397
    %vm521 = vweird.f32 %v515
    %vm522 = vmor %vm520, %vm521
    %v523 = vsel %vm522, %v515, %v519
    %v524 = vand.u32 2147483647, %v397
    %vm525 = vcmp.eq.f32.partialorder %v524, 8.507059e+37
    %v526 = vand.u32 %v397, 2147483648
    %v527 = vor.u32 1.1754944e-38, %v526
    %v528 = vsel %vm525, %v527, %v523
    %v529 = vmul.f32 1.0, %v528
    %v530 = vrcp.pop %v398
    %v531 = vmul.f32 %v398, %v530
    %v532 = vsub.f32 1.0, %v531
    %v533 = vmul.f32 %v530, %v532
    %v534 = vadd.f32 %v530, %v533
    %vm535 = vweird.f32 %v398
    %vm536 = vweird.f32 %v530
    %vm537 = vmor %vm535, %vm536
    %v538 = vsel %vm537, %v530, %v534
    %v539 = vand.u32 2147483647, %v398
    %vm540 = vcmp.eq.f32.partialorder %v539, 8.507059e+37
    %v541 = vand.u32 %v398, 2147483648
    %v542 = vor.u32 1.1754944e-38, %v541
    %v543 = vsel %vm540, %v542, %v538
    %v544 = vmul.f32 1.0, %v543
    %v545 = vrcp.pop %v399
    %v546 = vmul.f32 %v399, %v545
    %v547 = vsub.f32 1.0, %v546
    %v548 = vmul.f32 %v545, %v547
    %v549 = vadd.f32 %v545, %v548
    %vm550 = vweird.f32 %v399
    %vm551 = vweird.f32 %v545
    %vm552 = vmor %vm550, %vm551
    %v553 = vsel %vm552, %v545, %v549
    %v554 = vand.u32 2147483647, %v399
    %vm555 = vcmp.eq.f32.partialorder %v554, 8.507059e+37
    %v556 = vand.u32 %v399, 2147483648
    %v557 = vor.u32 1.1754944e-38, %v556
    %v558 = vsel %vm555, %v557, %v553
    %v559 = vmul.f32 1.0, %v558
    %v560 = vrcp.pop %v400
    %v561 = vmul.f32 %v400, %v560
    %v562 = vsub.f32 1.0, %v561
    %v563 = vmul.f32 %v560, %v562
    %v564 = vadd.f32 %v560, %v563
    %vm565 = vweird.f32 %v400
    %vm566 = vweird.f32 %v560
    %vm567 = vmor %vm565, %vm566
    %v568 = vsel %vm567, %v560, %v564
    %v569 = vand.u32 2147483647, %v400
    %vm570 = vcmp.eq.f32.partialorder %v569, 8.507059e+37
    %v571 = vand.u32 %v400, 2147483648
    %v572 = vor.u32 1.1754944e-38, %v571
    %v573 = vsel %vm570, %v572, %v568
    %v574 = vmul.f32 1.0, %v573
    %v575 = vrcp.pop %v401
    %v576 = vmul.f32 %v401, %v575
    %v577 = vsub.f32 1.0, %v576
    %v578 = vmul.f32 %v575, %v577
    %v579 = vadd.f32 %v575, %v578
    %vm580 = vweird.f32 %v401
    %vm581 = vweird.f32 %v575
    %vm582 = vmor %vm580, %vm581
    %v583 = vsel %vm582, %v575, %v579
    %v584 = vand.u32 2147483647, %v401
    %vm585 = vcmp.eq.f32.partialorder %v584, 8.507059e+37
    %v586 = vand.u32 %v401, 2147483648
    %v587 = vor.u32 1.1754944e-38, %v586
    %v588 = vsel %vm585, %v587, %v583
    %v589 = vmul.f32 1.0, %v588
    %v590 = vrcp.pop %v402
    %v591 = vmul.f32 %v402, %v590
    %v592 = vsub.f32 1.0, %v591
    %v593 = vmul.f32 %v590, %v592
    %v594 = vadd.f32 %v590, %v593
    %vm595 = vweird.f32 %v402
    %vm596 = vweird.f32 %v590
    %vm597 = vmor %vm595, %vm596
    %v598 = vsel %vm597, %v590, %v594
    %v599 = vand.u32 2147483647, %v402
    %vm600 = vcmp.eq.f32.partialorder %v599, 8.507059e+37
    %v601 = vand.u32 %v402, 2147483648
    %v602 = vor.u32 1.1754944e-38, %v601
    %v603 = vsel %vm600, %v602, %v598
    %v604 = vmul.f32 1.0, %v603
    %v605 = vrcp.pop %v403
    %v606 = vmul.f32 %v403, %v605
    %v607 = vsub.f32 1.0, %v606
    %v608 = vmul.f32 %v605, %v607
    %v609 = vadd.f32 %v605, %v608
    %vm610 = vweird.f32 %v403
    %vm611 = vweird.f32 %v605
    %vm612 = vmor %vm610, %vm611
    %v613 = vsel %vm612, %v605, %v609
    %v614 = vand.u32 2147483647, %v403
    %vm615 = vcmp.eq.f32.partialorder %v614, 8.507059e+37
    %v616 = vand.u32 %v403, 2147483648
    %v617 = vor.u32 1.1754944e-38, %v616
    %v618 = vsel %vm615, %v617, %v613
    %v619 = vmul.f32 1.0, %v618
    %v620 = vrcp.pop %v404
    %v621 = vmul.f32 %v404, %v620
    %v622 = vsub.f32 1.0, %v621
    %v623 = vmul.f32 %v620, %v622
    %v624 = vadd.f32 %v620, %v623
    %vm625 = vweird.f32 %v404
    %vm626 = vweird.f32 %v620
    %vm627 = vmor %vm625, %vm626
    %v628 = vsel %vm627, %v620, %v624
    %v629 = vand.u32 2147483647, %v404
    %vm630 = vcmp.eq.f32.partialorder %v629, 8.507059e+37
    %v631 = vand.u32 %v404, 2147483648
    %v632 = vor.u32 1.1754944e-38, %v631
    %v633 = vsel %vm630, %v632, %v628
    %v634 = vmul.f32 1.0, %v633
    %v635 = vrcp.pop %v405
    %v636 = vmul.f32 %v405, %v635
    %v637 = vsub.f32 1.0, %v636
    %v638 = vmul.f32 %v635, %v637
    %v639 = vadd.f32 %v635, %v638
    %vm640 = vweird.f32 %v405
    %vm641 = vweird.f32 %v635
    %vm642 = vmor %vm640, %vm641
    %v643 = vsel %vm642, %v635, %v639
    %v644 = vand.u32 2147483647, %v405
    %vm645 = vcmp.eq.f32.partialorder %v644, 8.507059e+37
    %v646 = vand.u32 %v405, 2147483648
    %v647 = vor.u32 1.1754944e-38, %v646
    %v648 = vsel %vm645, %v647, %v643
    %v649 = vmul.f32 1.0, %v648
    %v650 = vrcp.pop %v406
    %v651 = vmul.f32 %v406, %v650
    %v652 = vsub.f32 1.0, %v651
    %v653 = vmul.f32 %v650, %v652
    %v654 = vadd.f32 %v650, %v653
    %vm655 = vweird.f32 %v406
    %vm656 = vweird.f32 %v650
    %vm657 = vmor %vm655, %vm656
    %v658 = vsel %vm657, %v650, %v654
    %v659 = vand.u32 2147483647, %v406
    %vm660 = vcmp.eq.f32.partialorder %v659, 8.507059e+37
    %v661 = vand.u32 %v406, 2147483648
    %v662 = vor.u32 1.1754944e-38, %v661
    %v663 = vsel %vm660, %v662, %v658
    %v664 = vmul.f32 1.0, %v663
    %v665 = vrcp.pop %v407
    %v666 = vmul.f32 %v407, %v665
    %v667 = vsub.f32 1.0, %v666
    %v668 = vmul.f32 %v665, %v667
    %v669 = vadd.f32 %v665, %v668
    %vm670 = vweird.f32 %v407
    %vm671 = vweird.f32 %v665
    %vm672 = vmor %vm670, %vm671
    %v673 = vsel %vm672, %v665, %v669
    %v674 = vand.u32 2147483647, %v407
    %vm675 = vcmp.eq.f32.partialorder %v674, 8.507059e+37
    %v676 = vand.u32 %v407, 2147483648
    %v677 = vor.u32 1.1754944e-38, %v676
    %v678 = vsel %vm675, %v677, %v673
    %v679 = vmul.f32 1.0, %v678
    %v680 = vrcp.pop %v408
    %v681 = vmul.f32 %v408, %v680
    %v682 = vsub.f32 1.0, %v681
    %v683 = vmul.f32 %v680, %v682
    %v684 = vadd.f32 %v680, %v683
    %vm685 = vweird.f32 %v408
    %vm686 = vweird.f32 %v680
    %vm687 = vmor %vm685, %vm686
    %v688 = vsel %vm687, %v680, %v684
    %v689 = vand.u32 2147483647, %v408
    %vm690 = vcmp.eq.f32.partialorder %v689, 8.507059e+37
    %v691 = vand.u32 %v408, 2147483648
    %v692 = vor.u32 1.1754944e-38, %v691
    %v693 = vsel %vm690, %v692, %v688
    %v694 = vmul.f32 1.0, %v693
    %v695 = vrcp.pop %v409
    %v696 = vmul.f32 %v409, %v695
    %v697 = vsub.f32 1.0, %v696
    %v698 = vmul.f32 %v695, %v697
    %v699 = vadd.f32 %v695, %v698
    %vm700 = vweird.f32 %v409
    %vm701 = vweird.f32 %v695
    %vm702 = vmor %vm700, %vm701
    %v703 = vsel %vm702, %v695, %v699
    %v704 = vand.u32 2147483647, %v409
    %vm705 = vcmp.eq.f32.partialorder %v704, 8.507059e+37
    %v706 = vand.u32 %v409, 2147483648
    %v707 = vor.u32 1.1754944e-38, %v706
    %v708 = vsel %vm705, %v707, %v703
    %v709 = vmul.f32 1.0, %v708
    %v710 = vsub.f32 %v310, %v60
    %v711 = vsub.f32 %v311, %v61
    %v712 = vsub.f32 %v312, %v62
    %v713 = vsub.f32 %v313, %v63
    %v714 = vsub.f32 %v314, %v64
    %v715 = vsub.f32 %v315, %v65
    %v716 = vsub.f32 %v316, %v66
    %v717 = vsub.f32 %v317, %v67
    %v718 = vsub.f32 %v318, %v68
    %v719 = vsub.f32 %v319, %v69
    %v720 = vsub.f32 %v320, %v70
    %v721 = vsub.f32 %v321, %v71
    %v722 = vsub.f32 %v322, %v72
    %v723 = vsub.f32 %v323, %v73
    %v724 = vsub.f32 %v324, %v74
    %v725 = vsub.f32 %v325, %v75
    %v726 = vsub.f32 %v326, %v76
    %v727 = vsub.f32 %v327, %v77
    %v728 = vsub.f32 %v328, %v78
    %v729 = vsub.f32 %v329, %v79
    %v730 = vmul.f32 %v424, %v710
    %v731 = vmul.f32 %v439, %v711
    %v732 = vmul.f32 %v454, %v712
    %v733 = vmul.f32 %v469, %v713
    %v734 = vmul.f32 %v484, %v714
    %v735 = vmul.f32 %v499, %v715
    %v736 = vmul.f32 %v514, %v716
    %v737 = vmul.f32 %v529, %v717
    %v738 = vmul.f32 %v544, %v718
    %v739 = vmul.f32 %v559, %v719
    %v740 = vmul.f32 %v574, %v720
    %v741 = vmul.f32 %v589, %v721
    %v742 = vmul.f32 %v604, %v722
    %v743 = vmul.f32 %v619, %v723
    %v744 = vmul.f32 %v634, %v724
    %v745 = vmul.f32 %v649, %v725
    %v746 = vmul.f32 %v664, %v726
    %v747 = vmul.f32 %v679, %v727
    %v748 = vmul.f32 %v694, %v728
    %v749 = vmul.f32 %v709, %v729
    %v750 = vadd.f32 %v60, %v730
    %v751 = vadd.f32 %v61, %v731
    %v752 = vadd.f32 %v62, %v732
    %v753 = vadd.f32 %v63, %v733
    %v754 = vadd.f32 %v64, %v734
    %v755 = vadd.f32 %v65, %v735
    %v756 = vadd.f32 %v66, %v736
    %v757 = vadd.f32 %v67, %v737
    %v758 = vadd.f32 %v68, %v738
    %v759 = vadd.f32 %v69, %v739
    %v760 = vadd.f32 %v70, %v740
    %v761 = vadd.f32 %v71, %v741
    %v762 = vadd.f32 %v72, %v742
    %v763 = vadd.f32 %v73, %v743
    %v764 = vadd.f32 %v74, %v744
    %v765 = vadd.f32 %v75, %v745
    %v766 = vadd.f32 %v76, %v746
    %v767 = vadd.f32 %v77, %v747
    %v768 = vadd.f32 %v78, %v748
    %v769 = vadd.f32 %v79, %v749
    %770 = vst [vmem:[#allocation8] sm:$0xff] %v750
    %771 = vst [vmem:[#allocation8 + $0x8] sm:$0xff] %v751
    %772 = vst [vmem:[#allocation8 + $0x10] sm:$0xff] %v752
    %773 = vst [vmem:[#allocation8 + $0x18] sm:$0xff] %v753
    %774 = vst [vmem:[#allocation8 + $0x20] sm:$0xff] %v754
    %775 = vst [vmem:[#allocation8 + $0x28] sm:$0xff] %v755
    %776 = vst [vmem:[#allocation8 + $0x30] sm:$0xff] %v756
    %777 = vst [vmem:[#allocation8 + $0x38] sm:$0xff] %v757
    %778 = vst [vmem:[#allocation8 + $0x40] sm:$0xff] %v758
    %779 = vst [vmem:[#allocation8 + $0x48] sm:$0xff] %v759
    %780 = vst [vmem:[#allocation8 + $0x50] sm:$0xff] %v760
    %781 = vst [vmem:[#allocation8 + $0x58] sm:$0xff] %v761
    %782 = vst [vmem:[#allocation8 + $0x60] sm:$0xff] %v762
    %783 = vst [vmem:[#allocation8 + $0x68] sm:$0xff] %v763
    %784 = vst [vmem:[#allocation8 + $0x70] sm:$0xff] %v764
    %785 = vst [vmem:[#allocation8 + $0x78] sm:$0xff] %v765
    %786 = vst [vmem:[#allocation8 + $0x80] sm:$0xff] %v766
    %787 = vst [vmem:[#allocation8 + $0x88] sm:$0xff] %v767
    %788 = vst [vmem:[#allocation8 + $0x90] sm:$0xff] %v768
    %789 = vst [vmem:[#allocation8 + $0x98] sm:$0xff] %v769
    // Predicated region
    $region26: #{tpu_custom_call.1} parent=1 // pred_check
      _
    $region27: #{tpu_custom_call.1} parent=1 // pred_check_branch
      %791 = sbr.rel (0) target = $region29
    $region28: #{tpu_custom_call.1} parent=1 // pred_region
      %793 = vsyncadd [#allocation4], 0
      %s794 = sshll.u32 [#allocation8], 4
      %s795 = int_to_ptr.vmem [resolvable:$true] %s794
      %s796 = sshll.u32 %s3, 4
      %s797 = int_to_ptr.hbm [resolvable:$true] %s796
      %802 = dma.vmem_to_hbm [thread:$0]  %s795, 2560, %s797, [#allocation4], 128, 128, 8
    $region29: #{tpu_custom_call.1} parent=1 // pred_fallthru
      _
    // Predicated region
    $region30: #{tpu_custom_call.1} parent=1 // pred_check
      _
    $region31: #{tpu_custom_call.1} parent=1 // pred_check_branch
      %804 = sbr.rel (0) target = $region33
    $region32: #{tpu_custom_call.1} parent=1 // pred_region
      %806 = dma.done [#allocation4], 2560
    $region33: #{tpu_custom_call.1} parent=1 // pred_fallthru
      _
    %807 = vsyncpa [#allocation3], 1
    %808 = vsyncpa [#allocation6], 1
    %809 = vsyncpa [#allocation4], 1

</llo_original>
